<compile_context>
chip_gen: v7x
topology: tpu7x:2x2x1
jax: 0.10.0
libtpu: 0.0.40
codegen_flags: <defaults>
</compile_context>

<pallas_src>
import functools
import math

import jax
import jax.numpy as jnp
from jax.experimental import pallas as pl
from jax.experimental.pallas import tpu as pltpu

ACT_DTYPE = jnp.bfloat16   # activation / big-weight dtype; accumulation is f32
_GELU_C = math.sqrt(2.0 / math.pi)


def _pick_tile(dim, candidates):
    """Largest candidate tile that divides `dim`, else the full dim."""
    for c in candidates:
        if dim % c == 0:
            return c
    return dim


def _layernorm_f32(y, gamma, beta, eps):
    """Single-pass LayerNorm over the last axis (y is f32)."""
    mu = jnp.mean(y, axis=-1, keepdims=True)
    ms = jnp.mean(y * y, axis=-1, keepdims=True)
    var = ms - mu * mu
    return (y - mu) * jax.lax.rsqrt(var + eps) * gamma + beta


def _gelu_tanh(x):
    """tanh-approximate GELU (EUP path instead of erf VALU polynomial)."""
    return 0.5 * x * (1.0 + jnp.tanh(_GELU_C * (x + 0.044715 * x * x * x)))


# --------------------------------------------------------------------------- #
# Fused transformer layer: QKV proj + attention + proj/res/LN + FFN/res/LN
# One grid step per batch row; everything stays in VMEM/vregs.
# --------------------------------------------------------------------------- #
def _layer_kernel(x_ref, mask_ref,
                  qkv_w_ref, qkv_b_ref,
                  o_w_ref, o_b_ref, sa_g_ref, sa_b_ref,
                  w1_ref, b1_ref, w2_ref, b2_ref, out_g_ref, out_b_ref,
                  o_ref, *, n_heads, d_head, eps):
    x = x_ref[...]                                    # (S, D) bf16
    mask = mask_ref[0]                                # (1, S) f32 additive bias
    d_model = n_heads * d_head
    scale = 1.0 / math.sqrt(d_head)

    # ---- fused Q/K/V projection -----------------------------------------
    qkv = jnp.dot(x, qkv_w_ref[...], preferred_element_type=jnp.float32)
    qkv = (qkv + qkv_b_ref[...].astype(jnp.float32)).astype(ACT_DTYPE)  # (S, 3D)

    # ---- multi-head attention (heads unrolled; tiny at this config) -----
    # TODO(synk): at real shapes use a head grid axis + KV-blocked flash softmax.
    ctxs = []
    for h in range(n_heads):
        q = qkv[:, h * d_head:(h + 1) * d_head]
        k = qkv[:, d_model + h * d_head:d_model + (h + 1) * d_head]
        v = qkv[:, 2 * d_model + h * d_head:2 * d_model + (h + 1) * d_head]
        # contract feature axes directly -> no explicit k.T relayout
        s = jax.lax.dot_general(q, k, (((1,), (1,)), ((), ())),
                                preferred_element_type=jnp.float32)
        s = s * scale + mask
        s = s - jnp.max(s, axis=-1, keepdims=True)
        p = jnp.exp(s)
        p = p * pl.reciprocal(jnp.sum(p, axis=-1, keepdims=True), approx=True)
        ctxs.append(jnp.dot(p.astype(v.dtype), v,
                            preferred_element_type=jnp.float32))
    ctx = jnp.concatenate(ctxs, axis=-1).astype(ACT_DTYPE)             # (S, D)

    # ---- attention output projection + residual + LayerNorm -------------
    y = jnp.dot(ctx, o_w_ref[...], preferred_element_type=jnp.float32)
    y = y + o_b_ref[...].astype(jnp.float32) + x.astype(jnp.float32)
    y = _layernorm_f32(y, sa_g_ref[...], sa_b_ref[...], eps)            # f32

    # ---- FFN (lin1 + GELU + lin2) + residual + LayerNorm -----------------
    h1 = jnp.dot(y.astype(ACT_DTYPE), w1_ref[...],
                 preferred_element_type=jnp.float32)
    h1 = _gelu_tanh(h1 + b1_ref[...].astype(jnp.float32))
    z = jnp.dot(h1.astype(ACT_DTYPE), w2_ref[...],
                preferred_element_type=jnp.float32)
    z = z + b2_ref[...].astype(jnp.float32) + y
    z = _layernorm_f32(z, out_g_ref[...], out_b_ref[...], eps)

    o_ref[...] = z.astype(o_ref.dtype)


def transformer_layer_pallas(x, mask_add, lp, B, S, n_heads, d_head, eps=1e-12):
    """x: (B*S, D) bf16, mask_add: (B, 1, S) f32 additive -> (B*S, D) bf16."""
    D = n_heads * d_head
    Dff = lp["lin1"]["w"].shape[1]
    kernel = functools.partial(_layer_kernel, n_heads=n_heads, d_head=d_head,
                               eps=eps)

    def wspec(shape):
        # grid-invariant weight/scale tile
        # TODO(synk): pipeline_mode=pl.Buffered(1) here at real shapes (v7x VMEM).
        return pl.BlockSpec(shape, lambda b: (0, 0))

    return pl.pallas_call(
        kernel,
        out_shape=jax.ShapeDtypeStruct((B * S, D), ACT_DTYPE),
        grid=(B,),
        in_specs=[
            pl.BlockSpec((S, D), lambda b: (b, 0)),          # x (one batch row)
            pl.BlockSpec((1, 1, S), lambda b: (b, 0, 0)),    # additive mask
            wspec((D, 3 * D)), wspec((1, 3 * D)),            # qkv
            wspec((D, D)), wspec((1, D)),                    # out proj
            wspec((1, D)), wspec((1, D)),                    # sa LN gamma/beta
            wspec((D, Dff)), wspec((1, Dff)),                # lin1
            wspec((Dff, D)), wspec((1, D)),                  # lin2
            wspec((1, D)), wspec((1, D)),                    # out LN gamma/beta
        ],
        out_specs=pl.BlockSpec((S, D), lambda b: (b, 0)),
        compiler_params=pltpu.CompilerParams(
            dimension_semantics=("parallel",),
            vmem_limit_bytes=64 * 1024 * 1024),
    )(x, mask_add,
      lp["qkv"]["w"], lp["qkv"]["b"].reshape(1, 3 * D),
      lp["o"]["w"], lp["o"]["b"].reshape(1, D),
      lp["sa_ln_g"].reshape(1, D), lp["sa_ln_b"].reshape(1, D),
      lp["lin1"]["w"], lp["lin1"]["b"].reshape(1, Dff),
      lp["lin2"]["w"], lp["lin2"]["b"].reshape(1, D),
      lp["out_ln_g"].reshape(1, D), lp["out_ln_b"].reshape(1, D))


# --------------------------------------------------------------------------- #
# Plain LayerNorm (embedding LN; single-pass stats)
# --------------------------------------------------------------------------- #
def _ln_kernel(x_ref, g_ref, b_ref, o_ref, *, eps):
    x = x_ref[...].astype(jnp.float32)
    o_ref[...] = _layernorm_f32(x, g_ref[...], b_ref[...], eps).astype(o_ref.dtype)


def layernorm_pallas(x, gamma, beta, eps=1e-12):
    M, D = x.shape
    tm = _pick_tile(M, (512, 256, 128))
    kernel = functools.partial(_ln_kernel, eps=eps)
    return pl.pallas_call(
        kernel,
        out_shape=jax.ShapeDtypeStruct((M, D), ACT_DTYPE),
        grid=(M // tm,),
        in_specs=[
            pl.BlockSpec((tm, D), lambda i: (i, 0)),
            pl.BlockSpec((1, D), lambda i: (0, 0)),
            pl.BlockSpec((1, D), lambda i: (0, 0)),
        ],
        out_specs=pl.BlockSpec((tm, D), lambda i: (i, 0)),
        compiler_params=pltpu.CompilerParams(dimension_semantics=("parallel",)),
    )(x, gamma.reshape(1, D), beta.reshape(1, D))


# --------------------------------------------------------------------------- #
# Fused classification head: pre_classifier + ReLU + classifier (bf16, f32 acc)
# --------------------------------------------------------------------------- #
def _cls_head_kernel(x_ref, w1_ref, b1_ref, w2_ref, b2_ref, o_ref):
    h = jnp.dot(x_ref[...], w1_ref[...], preferred_element_type=jnp.float32)
    h = jnp.maximum(h + b1_ref[...], 0.0)
    y = jnp.dot(h.astype(ACT_DTYPE), w2_ref[...],
                preferred_element_type=jnp.float32)
    o_ref[...] = (y + b2_ref[...]).astype(o_ref.dtype)


def classifier_head_pallas(pooled, w1, b1, w2, b2, num_labels):
    B, D = pooled.shape
    return pl.pallas_call(
        _cls_head_kernel,
        out_shape=jax.ShapeDtypeStruct((B, num_labels), jnp.float32),
        grid=(1,),
        in_specs=[
            pl.BlockSpec((B, D), lambda i: (0, 0)),
            pl.BlockSpec((D, D), lambda i: (0, 0)),
            pl.BlockSpec((1, D), lambda i: (0, 0)),
            pl.BlockSpec((D, num_labels), lambda i: (0, 0)),
            pl.BlockSpec((1, num_labels), lambda i: (0, 0)),
        ],
        out_specs=pl.BlockSpec((B, num_labels), lambda i: (0, 0)),
        compiler_params=pltpu.CompilerParams(dimension_semantics=("arbitrary",)),
    )(pooled.astype(ACT_DTYPE), w1, b1.reshape(1, D), w2,
      b2.reshape(1, num_labels))


# --------------------------------------------------------------------------- #
# Model (tiny DistilBERT config, deterministic params)
# --------------------------------------------------------------------------- #
CFG = dict(vocab_size=100, max_pos=64, dim=32, n_heads=2, hidden_dim=64,
           n_layers=2, num_labels=2)


def init_params(key, cfg):
    def dense(k, fan_in, fan_out, w_dtype=ACT_DTYPE):
        k1, _ = jax.random.split(k)
        w = (jax.random.normal(k1, (fan_in, fan_out), jnp.float32)
             * 0.02).astype(w_dtype)
        b = jnp.zeros((fan_out,), jnp.float32)
        return {"w": w, "b": b}

    D = cfg["dim"]
    keys = jax.random.split(key, 4 + cfg["n_layers"])
    params = {
        "word_emb": (jax.random.normal(keys[0], (cfg["vocab_size"], D),
                                       jnp.float32) * 0.02).astype(ACT_DTYPE),
        "pos_emb": (jax.random.normal(keys[1], (cfg["max_pos"], D),
                                      jnp.float32) * 0.02).astype(ACT_DTYPE),
        "emb_ln_g": jnp.ones((D,), jnp.float32),
        "emb_ln_b": jnp.zeros((D,), jnp.float32),
        "layers": [],
        # head weights kept bf16 (f32 accumulation in-kernel; logits are f32)
        "pre_classifier": dense(keys[2], D, D),
        "classifier": dense(keys[3], D, cfg["num_labels"]),
    }
    for li in range(cfg["n_layers"]):
        lk = jax.random.split(keys[4 + li], 4)
        params["layers"].append({
            "qkv": dense(lk[0], D, 3 * D),     # fused Q/K/V projection
            "o": dense(lk[1], D, D),
            "sa_ln_g": jnp.ones((D,), jnp.float32),
            "sa_ln_b": jnp.zeros((D,), jnp.float32),
            "lin1": dense(lk[2], D, cfg["hidden_dim"]),
            "lin2": dense(lk[3], cfg["hidden_dim"], D),
            "out_ln_g": jnp.ones((D,), jnp.float32),
            "out_ln_b": jnp.zeros((D,), jnp.float32),
        })
    return params


def distilbert_classifier_forward(params, input_ids, attention_mask,
                                  labels=None, cfg=CFG):
    B, S = input_ids.shape
    D, H = cfg["dim"], cfg["n_heads"]
    Dh = D // H

    # --- embeddings (gather in JAX glue; no clean Pallas equivalent w/o DMA gather)
    pos_ids = jnp.arange(S, dtype=jnp.int32)
    emb = jnp.take(params["word_emb"], input_ids, axis=0) + \
          jnp.take(params["pos_emb"], pos_ids, axis=0)[None, :, :]
    x = layernorm_pallas(emb.reshape(B * S, D),
                         params["emb_ln_g"], params["emb_ln_b"])      # (B*S, D) bf16
    # dropout -> identity (eval mode)

    # additive attention mask, computed ONCE (0 keep, -1e9 masked)
    mask_add = (1.0 - attention_mask.astype(jnp.float32)).reshape(B, 1, S) * -1e9

    # --- transformer blocks: ONE pallas_call per layer
    for lp in params["layers"]:
        x = transformer_layer_pallas(x, mask_add, lp, B, S, H, Dh)    # (B*S, D)

    # --- classification head (CLS token = position 0), single fused kernel
    pooled = x.reshape(B, S, D)[:, 0, :]                              # (B, D)
    logits = classifier_head_pallas(pooled, params["pre_classifier"]["w"],
                                    params["pre_classifier"]["b"],
                                    params["classifier"]["w"],
                                    params["classifier"]["b"],
                                    cfg["num_labels"])                # (B, L) f32

    if labels is not None:
        # CrossEntropyLoss (mean) — tiny reduction, done in JAX glue.
        logp = jax.nn.log_softmax(logits, axis=-1)
        loss = -jnp.mean(jnp.take_along_axis(logp, labels[:, None], axis=-1))
        return loss, logits
    return {"logits": logits}


# --------------------------------------------------------------------------- #
if __name__ == "__main__":
    key = jax.random.PRNGKey(0)
    pkey, ikey, lkey = jax.random.split(key, 3)

    params = init_params(pkey, CFG)

    B, S = 2, 8
    input_ids = jax.random.randint(ikey, (B, S), 0, CFG["vocab_size"],
                                   dtype=jnp.int32)
    attention_mask = jnp.ones((B, S), dtype=jnp.int32).at[1, 6:].set(0)
    labels = jax.random.randint(lkey, (B,), 0, CFG["num_labels"], dtype=jnp.int32)

    # labels=None path -> {'logits': ...}
    out = distilbert_classifier_forward(params, input_ids, attention_mask)
    logits = jax.block_until_ready(out["logits"])

    # labels path -> (loss, logits)
    loss, logits2 = distilbert_classifier_forward(params, input_ids,
                                                  attention_mask, labels)
    loss = jax.block_until_ready(loss)
    logits2 = jax.block_until_ready(logits2)

    assert logits.shape == (B, CFG["num_labels"])
    assert logits2.shape == (B, CFG["num_labels"])
    assert loss.shape == ()
    assert bool(jnp.all(jnp.isfinite(logits))) and bool(jnp.isfinite(loss))
    print("KERNEL_OK")
</pallas_src>

<mosaic_0001>
module attributes {stable_mosaic.version = 11 : i64} {
  func.func @_ln_kernel(%arg0: i32, %arg1: memref<16x32xbf16, #tpu.memory_space<vmem>>, %arg2: memref<1x32xf32, #tpu.memory_space<vmem>>, %arg3: memref<1x32xf32, #tpu.memory_space<vmem>>, %arg4: memref<16x32xbf16, #tpu.memory_space<vmem>>) attributes {dimension_semantics = [#tpu.dimension_semantics<parallel>], iteration_bounds = array<i64: 1>, scalar_prefetch = 0 : i64, scratch_operands = 0 : i64, tpu.core_type = #tpu.core_type<tc>, window_params = [{transform_indices = @transform_0, window_bounds = array<i64: 16, 32>}, {pipeline_mode = #tpu.pipeline_mode<synchronous>, transform_indices = @transform_1, window_bounds = array<i64: 1, 32>}, {pipeline_mode = #tpu.pipeline_mode<synchronous>, transform_indices = @transform_2, window_bounds = array<i64: 1, 32>}, {transform_indices = @transform_3, window_bounds = array<i64: 16, 32>}]} {
    %c0 = arith.constant 0 : index
    %c0_0 = arith.constant 0 : index
    %0 = vector.load %arg1[%c0, %c0_0] : memref<16x32xbf16, #tpu.memory_space<vmem>>, vector<16x32xbf16>
    %1 = arith.extf %0 : vector<16x32xbf16> to vector<16x32xf32>
    %c0_1 = arith.constant 0 : index
    %c0_2 = arith.constant 0 : index
    %2 = vector.load %arg2[%c0_1, %c0_2] : memref<1x32xf32, #tpu.memory_space<vmem>>, vector<1x32xf32>
    %c0_3 = arith.constant 0 : index
    %c0_4 = arith.constant 0 : index
    %3 = vector.load %arg3[%c0_3, %c0_4] : memref<1x32xf32, #tpu.memory_space<vmem>>, vector<1x32xf32>
    %cst = arith.constant dense<0.000000e+00> : vector<16xf32>
    %4 = vector.multi_reduction <add>, %1, %cst [1] : vector<16x32xf32> to vector<16xf32>
    %5 = vector.shape_cast %4 : vector<16xf32> to vector<16x1xf32>
    %cst_5 = arith.constant 3.200000e+01 : f32
    %6 = vector.broadcast %cst_5 : f32 to vector<16x1xf32>
    %7 = arith.divf %5, %6 : vector<16x1xf32>
    %8 = arith.mulf %1, %1 : vector<16x32xf32>
    %cst_6 = arith.constant dense<0.000000e+00> : vector<16xf32>
    %9 = vector.multi_reduction <add>, %8, %cst_6 [1] : vector<16x32xf32> to vector<16xf32>
    %10 = vector.shape_cast %9 : vector<16xf32> to vector<16x1xf32>
    %cst_7 = arith.constant 3.200000e+01 : f32
    %11 = vector.broadcast %cst_7 : f32 to vector<16x1xf32>
    %12 = arith.divf %10, %11 : vector<16x1xf32>
    %13 = arith.mulf %7, %7 : vector<16x1xf32>
    %14 = arith.subf %12, %13 : vector<16x1xf32>
    %15 = vector.broadcast %7 : vector<16x1xf32> to vector<16x32xf32>
    %16 = arith.subf %1, %15 : vector<16x32xf32>
    %cst_8 = arith.constant 9.99999996E-13 : f32
    %17 = vector.broadcast %cst_8 : f32 to vector<16x1xf32>
    %18 = arith.addf %14, %17 : vector<16x1xf32>
    %19 = math.rsqrt %18 : vector<16x1xf32>
    %20 = vector.broadcast %19 : vector<16x1xf32> to vector<16x32xf32>
    %21 = arith.mulf %16, %20 : vector<16x32xf32>
    %22 = vector.broadcast %2 : vector<1x32xf32> to vector<16x32xf32>
    %23 = arith.mulf %21, %22 : vector<16x32xf32>
    %24 = vector.broadcast %3 : vector<1x32xf32> to vector<16x32xf32>
    %25 = arith.addf %23, %24 : vector<16x32xf32>
    %26 = arith.truncf %25 : vector<16x32xf32> to vector<16x32xbf16>
    %c0_9 = arith.constant 0 : index
    %c0_10 = arith.constant 0 : index
    %27 = vector.load %arg4[%c0_9, %c0_10] : memref<16x32xbf16, #tpu.memory_space<vmem>>, vector<16x32xbf16>
    tpu.vector_store %arg4[%c0_9, %c0_10], %26 {strides = array<i32>} : memref<16x32xbf16, #tpu.memory_space<vmem>>, vector<16x32xbf16>,
    return
  }
  func.func @transform_0(%arg0: i32) -> (i32, i32) {
    %c0_i32 = arith.constant 0 : i32
    %c0_i32_0 = arith.constant 0 : i32
    return %arg0, %c0_i32 : i32, i32
  }
  func.func @transform_1(%arg0: i32) -> (i32, i32) {
    %c0_i32 = arith.constant 0 : i32
    %c0_i32_0 = arith.constant 0 : i32
    %c0_i32_1 = arith.constant 0 : i32
    return %c0_i32, %c0_i32_0 : i32, i32
  }
  func.func @transform_2(%arg0: i32) -> (i32, i32) {
    %c0_i32 = arith.constant 0 : i32
    %c0_i32_0 = arith.constant 0 : i32
    %c0_i32_1 = arith.constant 0 : i32
    return %c0_i32, %c0_i32_0 : i32, i32
  }
  func.func @transform_3(%arg0: i32) -> (i32, i32) {
    %c0_i32 = arith.constant 0 : i32
    %c0_i32_0 = arith.constant 0 : i32
    return %arg0, %c0_i32 : i32, i32
  }
}

</mosaic_0001>

<llo_original>
// kernel: tpu_custom_call.1
$region0: #{tpu_custom_call.1}
  #allocation0 [shape = 'u32[]', space=smem, size = 0x4, offset = 0x4, fixed_abs, tag = 'smem constant byte address 0x4 - core index']
  #allocation1 [shape = 'u32[144,128]{1,0:T(1,128)}', space=vmem, size = 0x12000, scoped, tag = 'internal scratch']
  %s0 = inlined_call_operand.hbm [shape: bf16[16,32], index: 0, kind: input, shape index: {}]
  %s1 = inlined_call_operand.vmem [shape: f32[1,32], index: 1, kind: input, shape index: {}]
  %s2 = inlined_call_operand.vmem [shape: f32[1,32], index: 2, kind: input, shape index: {}]
  %s3 = inlined_call_operand.hbm [shape: bf16[16,32], index: 3, kind: output, shape index: {}]
  %s4 = sld [smem:[#allocation0]]
  $region26: #{tpu_custom_call.1} parent=0
    _
  %s6 = ssub.s32 1, %s4
  %s7 = scalar_select 0, %s6, %s4
  $region1: #{tpu_custom_call.1} parent=0
    #allocation2 [shape = 'u8[4096]{0}', space=vmem, size = 0x1000, scoped, tag = 'input window, operand 0, single buffered']
    #allocation3 [shape = 's32[1]{0}', space=sflag, size = 0x4, scoped, tag = 'scoped memory for tpu_custom_call.1']
    #allocation4 [shape = 's32[1]{0}', space=sflag, size = 0x4, scoped, tag = 'scoped memory for tpu_custom_call.1']
    #allocation5 [shape = 'u8[4096]{0}', space=vmem, size = 0x1000, scoped, tag = 'output window, operand 0, single buffered']
    %8 = vsyncpa [#allocation3], 0
    %9 = vsyncpa [#allocation4], 0
    // Predicated region
    $region2: #{tpu_custom_call.1} parent=1 // pred_check
      _
    $region3: #{tpu_custom_call.1} parent=1 // pred_check_branch
      %11 = sbr.rel (0) target = $region5
    $region4: #{tpu_custom_call.1} parent=1 // pred_region
      %s13 = ssub.s32 128, 128
      %14 = vsyncadd [#allocation3], %s13
      %s15 = sshll.u32 [#allocation2], 4
      %s16 = int_to_ptr.vmem [resolvable:$true] %s15
      %21 = dma.hbm_to_vmem [thread:$0]  %s0, 128, %s16, [#allocation3], 64, 64, 4
    $region5: #{tpu_custom_call.1} parent=1 // pred_fallthru
      _
    // Predicated region
    $region6: #{tpu_custom_call.1} parent=1 // pred_check
      _
    $region7: #{tpu_custom_call.1} parent=1 // pred_check_branch
      %23 = sbr.rel (0) target = $region9
    $region8: #{tpu_custom_call.1} parent=1 // pred_region
      _
    $region9: #{tpu_custom_call.1} parent=1 // pred_fallthru
      _
    // Predicated region
    $region10: #{tpu_custom_call.1} parent=1 // pred_check
      _
    $region11: #{tpu_custom_call.1} parent=1 // pred_check_branch
      %25 = sbr.rel (0) target = $region13
    $region12: #{tpu_custom_call.1} parent=1 // pred_region
      _
    $region13: #{tpu_custom_call.1} parent=1 // pred_fallthru
      _
    // Predicated region
    $region14: #{tpu_custom_call.1} parent=1 // pred_check
      _
    $region15: #{tpu_custom_call.1} parent=1 // pred_check_branch
      %27 = sbr.rel (0) target = $region17
    $region16: #{tpu_custom_call.1} parent=1 // pred_region
      %28 = dma.done [#allocation3], 128
    $region17: #{tpu_custom_call.1} parent=1 // pred_fallthru
      _
    %v29 = vld [vmem:[#allocation2] sm:$0xf]
    %v30 = vld [vmem:[#allocation2 + $0x4] sm:$0xf]
    %v31 = vunpack.c.l.bf16 %v29
    %v32 = vunpack.c.l.bf16 %v30
    %v33 = vld [vmem:[%s1] sm:$0x1]
    %v34 = vld [vmem:[%s2] sm:$0x1]
    %vm35 = vcmask 261120
    %v36 = vsel %vm35, %v31, 0.0
    %37 = vadd.xlane.f32.xlu0 %v36
    %v38 = vpop.xlane.xlu0 %37
    %v39 = vsel %vm35, %v32, 0.0
    %40 = vadd.xlane.f32.xlu0 %v39
    %v41 = vpop.xlane.xlu0 %40
    %v42 = vrcp.pop 32.0
    %v43 = vmul.f32 %v38, %v42
    %v44 = vmul.f32 %v41, %v42
    %v45 = vmul.f32 %v31, %v31
    %v46 = vmul.f32 %v32, %v32
    %v47 = vsel %vm35, %v45, 0.0
    %48 = vadd.xlane.f32.xlu0 %v47
    %v49 = vpop.xlane.xlu0 %48
    %v50 = vsel %vm35, %v46, 0.0
    %51 = vadd.xlane.f32.xlu0 %v50
    %v52 = vpop.xlane.xlu0 %51
    %v53 = vmul.f32 %v49, %v42
    %v54 = vmul.f32 %v52, %v42
    %v55 = vmul.f32 %v43, %v43
    %v56 = vmul.f32 %v44, %v44
    %v57 = vsub.f32 %v53, %v55
    %v58 = vsub.f32 %v54, %v56
    %v59 = vsub.f32 %v31, %v43
    %v60 = vsub.f32 %v32, %v44
    %v61 = vadd.f32 %v57, 1e-12
    %v62 = vadd.f32 %v58, 1e-12
    %v63 = vrsqrt.pop %v61
    %v64 = vrsqrt.pop %v62
    %v65 = vmul.f32 %v59, %v63
    %v66 = vmul.f32 %v60, %v64
    %v68 = vlaneseq
    %v69 = vshrl.u32 %v68, 7
    %v70 = vsub.s32 0, %v69
    %v71 = vrot.slane %v33, %v70
    %v73 = vmul.f32 %v65, %v71
    %v74 = vmul.f32 %v66, %v71
    %v76 = vlaneseq
    %v77 = vshrl.u32 %v76, 7
    %v78 = vsub.s32 0, %v77
    %v79 = vrot.slane %v34, %v78
    %v81 = vadd.f32 %v73, %v79
    %v82 = vadd.f32 %v74, %v79
    %v83 = vpack.c.bf16 %v82, %v81
    %v85 = vunpack.c.l.b16 %v83
    %v86 = vunpack.c.h.b16 %v83
    %v87 = vpack.c.b16 %v85, %v85
    %v88 = vpack.c.b16 %v86, %v86
    %vm91 = vcmask 257024
    %92 = vst.msk [vmem:[#allocation5] sm:$0xf] %vm91, %v87
    %93 = vst.msk [vmem:[#allocation5 + $0x4] sm:$0xf] %vm91, %v88
    // Predicated region
    $region18: #{tpu_custom_call.1} parent=1 // pred_check
      _
    $region19: #{tpu_custom_call.1} parent=1 // pred_check_branch
      %95 = sbr.rel (0) target = $region21
    $region20: #{tpu_custom_call.1} parent=1 // pred_region
      %s97 = ssub.s32 128, 128
      %98 = vsyncadd [#allocation4], %s97
      %s99 = sshll.u32 [#allocation5], 4
      %s100 = int_to_ptr.vmem [resolvable:$true] %s99
      %105 = dma.vmem_to_hbm [thread:$0]  %s100, 128, %s3, [#allocation4], 64, 64, 4
    $region21: #{tpu_custom_call.1} parent=1 // pred_fallthru
      _
    // Predicated region
    $region22: #{tpu_custom_call.1} parent=1 // pred_check
      _
    $region23: #{tpu_custom_call.1} parent=1 // pred_check_branch
      %107 = sbr.rel (0) target = $region25
    $region24: #{tpu_custom_call.1} parent=1 // pred_region
      %108 = dma.done [#allocation4], 128
    $region25: #{tpu_custom_call.1} parent=1 // pred_fallthru
      _
    %109 = vsyncpa [#allocation3], 1
    %110 = vsyncpa [#allocation4], 1

</llo_original>
